<compile_context>
chip_gen: v5e
topology: v5e:2x2
jax: 0.10.0
libtpu: 0.0.40
codegen_flags: <defaults>
</compile_context>

<pallas_src>
import jax
import jax.numpy as jnp
from jax.experimental import pallas as pl
from jax.experimental.pallas import tpu as pltpu


def _round_up(x, m):
    return ((x + m - 1) // m) * m


def _unembed_kernel(x_ref, w_ref, b_ref, o_ref):
    # x_ref: (tm, D) compute dtype   w_ref: (D, tn) compute dtype
    # b_ref: (1, tn) f32             o_ref: (tm, tn) out dtype
    acc = jnp.dot(x_ref[...], w_ref[...], preferred_element_type=jnp.float32)
    o_ref[...] = (acc + b_ref[...]).astype(o_ref.dtype)


def unembed(residual, W_U, b_U, *, tm=256, tn=1024,
            compute_dtype=jnp.bfloat16, out_dtype=None):
    """residual: [B, S, D], W_U: [D, V], b_U: [V] -> [B, S, V]."""
    B, S, D = residual.shape
    Dw, V = W_U.shape
    assert D == Dw, "d_model mismatch between residual and W_U"
    M = B * S
    out_dtype = residual.dtype if out_dtype is None else out_dtype

    # Clamp tiles for small problems while keeping sublane/lane alignment
    # (tm multiple of 16 for bf16 row packing, tn multiple of 128 for
    # lane-dense stores).
    tm = min(tm, _round_up(M, 16))
    tn = min(tn, _round_up(V, 128))

    M_pad = _round_up(M, tm)
    V_pad = _round_up(V, tn)

    # Flatten (batch, pos) -> M; cast matmul operands once in the wrapper.
    x2d = residual.reshape(M, D).astype(compute_dtype)
    w = W_U.astype(compute_dtype)
    b2d = b_U.astype(jnp.float32).reshape(1, V)  # bias cast hoisted out of kernel

    if M_pad != M:
        x2d = jnp.pad(x2d, ((0, M_pad - M), (0, 0)))
    if V_pad != V:
        w = jnp.pad(w, ((0, 0), (0, V_pad - V)))
        b2d = jnp.pad(b2d, ((0, 0), (0, V_pad - V)))

    n_tiles_n = V_pad // tn
    n_tiles_m = M_pad // tm
    grid = (n_tiles_n, n_tiles_m)  # vocab axis outer (slow), M inner (fast)

    cost = pl.CostEstimate(
        flops=2 * M_pad * D * V_pad,
        transcendentals=0,
        bytes_accessed=(
            n_tiles_n * M_pad * D * x2d.dtype.itemsize   # residual, re-read per vocab slab
            + D * V_pad * w.dtype.itemsize               # W_U read exactly once
            + V_pad * 4                                  # bias
            + M_pad * V_pad * jnp.dtype(out_dtype).itemsize  # output write
        ),
    )

    out2d = pl.pallas_call(
        _unembed_kernel,
        out_shape=jax.ShapeDtypeStruct((M_pad, V_pad), out_dtype),
        grid_spec=pl.GridSpec(
            grid=grid,
            in_specs=[
                pl.BlockSpec((tm, D), lambda j, i: (i, 0)),   # residual tile (fast axis)
                pl.BlockSpec((D, tn), lambda j, i: (0, j)),   # W_U slab (slow axis only)
                pl.BlockSpec((1, tn), lambda j, i: (0, j)),   # bias slab (f32)
            ],
            out_specs=pl.BlockSpec((tm, tn), lambda j, i: (i, j)),
        ),
        compiler_params=pltpu.CompilerParams(
            dimension_semantics=("parallel", "parallel"),
        ),
        cost_estimate=cost,
    )(x2d, w, b2d)

    return out2d[:M, :V].reshape(B, S, V)


def unembed_ref(residual, W_U, b_U):
    return jnp.einsum("bsd,dv->bsv", residual, W_U) + b_U


if __name__ == "__main__":
    # Small, deterministic config: batch=2, pos=8, d_model=32, d_vocab_out=128
    B, S, D, V = 2, 8, 32, 128
    key = jax.random.PRNGKey(0)
    k_res, k_w = jax.random.split(key)

    residual = jax.random.normal(k_res, (B, S, D), dtype=jnp.float32)
    # nn.Parameter(torch.empty(...)) is uninitialized in the module; initialize
    # deterministically here (kaiming-ish scale) — synthetic weights, no checkpoint.
    W_U = jax.random.normal(k_w, (D, V), dtype=jnp.float32) / jnp.sqrt(D)
    b_U = jax.random.normal(jax.random.PRNGKey(1), (V,), dtype=jnp.float32) * 0.1

    ref = unembed_ref(residual, W_U, b_U)

    # 1) Exactness check with f32 compute path.
    out_f32 = jax.block_until_ready(
        unembed(residual, W_U, b_U, compute_dtype=jnp.float32))
    assert out_f32.shape == (B, S, V)
    assert jnp.allclose(out_f32, ref, atol=1e-5, rtol=1e-5), "f32 path mismatch"

    # 2) Default fast path (bf16 matmul operands, f32 accumulation).
    out_bf16 = jax.block_until_ready(unembed(residual, W_U, b_U))
    assert out_bf16.shape == (B, S, V)
    assert jnp.allclose(out_bf16, ref, atol=5e-2, rtol=5e-2), "bf16 path mismatch"

    # 3) Ragged shapes (exercise M/V padding path; tm/tn no longer divide M/V).
    B2, S2, V2 = 2, 7, 100
    res2 = jax.random.normal(jax.random.PRNGKey(2), (B2, S2, D), dtype=jnp.float32)
    W2 = jax.random.normal(jax.random.PRNGKey(3), (D, V2), dtype=jnp.float32) / jnp.sqrt(D)
    b2 = jnp.zeros((V2,), dtype=jnp.float32)
    out2 = jax.block_until_ready(
        unembed(res2, W2, b2, compute_dtype=jnp.float32))
    assert out2.shape == (B2, S2, V2)
    assert jnp.allclose(out2, unembed_ref(res2, W2, b2), atol=1e-5, rtol=1e-5), \
        "padded-shape path mismatch"

    print("KERNEL_OK")
</pallas_src>

<mosaic_0001>
module attributes {stable_mosaic.version = 11 : i64} {
  func.func @_unembed_kernel(%arg0: i32, %arg1: i32, %arg2: memref<16x32xf32, #tpu.memory_space<vmem>>, %arg3: memref<32x128xf32, #tpu.memory_space<vmem>>, %arg4: memref<1x128xf32, #tpu.memory_space<vmem>>, %arg5: memref<16x128xf32, #tpu.memory_space<vmem>>) attributes {dimension_semantics = [#tpu.dimension_semantics<parallel>, #tpu.dimension_semantics<parallel>], iteration_bounds = array<i64: 1, 1>, scalar_prefetch = 0 : i64, scratch_operands = 0 : i64, tpu.core_type = #tpu.core_type<tc>, window_params = [{transform_indices = @transform_0, window_bounds = array<i64: 16, 32>}, {transform_indices = @transform_1, window_bounds = array<i64: 32, 128>}, {transform_indices = @transform_2, window_bounds = array<i64: 1, 128>}, {transform_indices = @transform_3, window_bounds = array<i64: 16, 128>}]} {
    %c0 = arith.constant 0 : index
    %c0_0 = arith.constant 0 : index
    %0 = vector.load %arg2[%c0, %c0_0] : memref<16x32xf32, #tpu.memory_space<vmem>>, vector<16x32xf32>
    %c0_1 = arith.constant 0 : index
    %c0_2 = arith.constant 0 : index
    %1 = vector.load %arg3[%c0_1, %c0_2] : memref<32x128xf32, #tpu.memory_space<vmem>>, vector<32x128xf32>
    %cst = arith.constant dense<0.000000e+00> : vector<16x128xf32>
    %2 = tpu.matmul %0, %1, %cst {dimension_numbers = #tpu.dot_dimension_numbers<[1], [0], [0], [1], [0, 0, 1, 1], [], []>} : vector<16x32xf32>, vector<32x128xf32>, vector<16x128xf32> -> vector<16x128xf32>
    %c0_3 = arith.constant 0 : index
    %c0_4 = arith.constant 0 : index
    %3 = vector.load %arg4[%c0_3, %c0_4] : memref<1x128xf32, #tpu.memory_space<vmem>>, vector<1x128xf32>
    %4 = vector.broadcast %3 : vector<1x128xf32> to vector<16x128xf32>
    %5 = arith.addf %2, %4 : vector<16x128xf32>
    %c0_5 = arith.constant 0 : index
    %c0_6 = arith.constant 0 : index
    %6 = vector.load %arg5[%c0_5, %c0_6] : memref<16x128xf32, #tpu.memory_space<vmem>>, vector<16x128xf32>
    tpu.vector_store %arg5[%c0_5, %c0_6], %5 {strides = array<i32>} : memref<16x128xf32, #tpu.memory_space<vmem>>, vector<16x128xf32>,
    return
  }
  func.func @transform_0(%arg0: i32, %arg1: i32) -> (i32, i32) {
    %c0_i32 = arith.constant 0 : i32
    %c0_i32_0 = arith.constant 0 : i32
    return %arg1, %c0_i32 : i32, i32
  }
  func.func @transform_1(%arg0: i32, %arg1: i32) -> (i32, i32) {
    %c0_i32 = arith.constant 0 : i32
    %c0_i32_0 = arith.constant 0 : i32
    return %c0_i32, %arg0 : i32, i32
  }
  func.func @transform_2(%arg0: i32, %arg1: i32) -> (i32, i32) {
    %c0_i32 = arith.constant 0 : i32
    %c0_i32_0 = arith.constant 0 : i32
    return %c0_i32, %arg0 : i32, i32
  }
  func.func @transform_3(%arg0: i32, %arg1: i32) -> (i32, i32) {
    %c0_i32 = arith.constant 0 : i32
    return %arg1, %arg0 : i32, i32
  }
}

</mosaic_0001>

<llo_original>
// kernel: tpu_custom_call.1
$region0: #{tpu_custom_call.1}
  #allocation0 [shape = 'u32[]', space=smem, size = 0x4, offset = 0x4, fixed_abs, tag = 'smem constant byte address 0x4 - core index']
  #allocation1 [shape = 'u32[72,128]{1,0:T(1,128)}', space=vmem, size = 0x9000, scoped, tag = 'internal scratch']
  %s0 = inlined_call_operand.hbm [shape: f32[16,32], index: 0, kind: input, shape index: {}]
  %s1 = inlined_call_operand.hbm [shape: f32[32,128], index: 1, kind: input, shape index: {}]
  %s2 = inlined_call_operand.vmem [shape: f32[1,128], index: 2, kind: input, shape index: {}]
  %s3 = inlined_call_operand.hbm [shape: f32[16,128], index: 3, kind: output, shape index: {}]
  %s4 = sld [smem:[#allocation0]]
  $region30: #{tpu_custom_call.1} parent=0
    _
  %s6 = ssub.s32 1, %s4
  %s7 = scalar_select 0, %s6, %s4
  $region1: #{tpu_custom_call.1} parent=0
    #allocation2 [shape = 'u8[8192]{0}', space=vmem, size = 0x2000, scoped, tag = 'input window, operand 0, single buffered']
    #allocation3 [shape = 's32[1]{0}', space=sflag, size = 0x4, scoped, tag = 'scoped memory for tpu_custom_call.1']
    #allocation4 [shape = 's32[1]{0}', space=sflag, size = 0x4, scoped, tag = 'scoped memory for tpu_custom_call.1']
    #allocation5 [shape = 'u8[16384]{0}', space=vmem, size = 0x4000, scoped, tag = 'input window, operand 1, single buffered']
    #allocation6 [shape = 's32[1]{0}', space=sflag, size = 0x4, scoped, tag = 'scoped memory for tpu_custom_call.1']
    #allocation7 [shape = 'u8[8192]{0}', space=vmem, size = 0x2000, scoped, tag = 'output window, operand 0, single buffered']
    %8 = vsyncpa [#allocation3], 0
    %9 = vsyncpa [#allocation6], 0
    %10 = vsyncpa [#allocation4], 0
    // Predicated region
    $region2: #{tpu_custom_call.1} parent=1 // pred_check
      _
    $region3: #{tpu_custom_call.1} parent=1 // pred_check_branch
      %12 = sbr.rel (0) target = $region5
    $region4: #{tpu_custom_call.1} parent=1 // pred_region
      %14 = vsyncadd [#allocation3], 0
      %s15 = sshll.u32 %s0, 4
      %s16 = int_to_ptr.hbm [resolvable:$true] %s15
      %s17 = sshll.u32 [#allocation2], 4
      %s18 = int_to_ptr.vmem [resolvable:$true] %s17
      %23 = dma.hbm_to_vmem [thread:$0]  %s16, 256, %s18, [#allocation3], 128, 128, 8
    $region5: #{tpu_custom_call.1} parent=1 // pred_fallthru
      _
    // Predicated region
    $region6: #{tpu_custom_call.1} parent=1 // pred_check
      _
    $region7: #{tpu_custom_call.1} parent=1 // pred_check_branch
      %25 = sbr.rel (0) target = $region9
    $region8: #{tpu_custom_call.1} parent=1 // pred_region
      %27 = vsyncadd [#allocation6], 0
      %s28 = sshll.u32 %s1, 4
      %s29 = int_to_ptr.hbm [resolvable:$true] %s28
      %s30 = sshll.u32 [#allocation5], 4
      %s31 = int_to_ptr.vmem [resolvable:$true] %s30
      %36 = dma.hbm_to_vmem [thread:$0]  %s29, 512, %s31, [#allocation6], 128, 128, 8
    $region9: #{tpu_custom_call.1} parent=1 // pred_fallthru
      _
    // Predicated region
    $region10: #{tpu_custom_call.1} parent=1 // pred_check
      _
    $region11: #{tpu_custom_call.1} parent=1 // pred_check_branch
      %38 = sbr.rel (0) target = $region13
    $region12: #{tpu_custom_call.1} parent=1 // pred_region
      _
    $region13: #{tpu_custom_call.1} parent=1 // pred_fallthru
      _
    // Predicated region
    $region14: #{tpu_custom_call.1} parent=1 // pred_check
      _
    $region15: #{tpu_custom_call.1} parent=1 // pred_check_branch
      %40 = sbr.rel (0) target = $region17
    $region16: #{tpu_custom_call.1} parent=1 // pred_region
      %42 = dma.done [#allocation3], 256
    $region17: #{tpu_custom_call.1} parent=1 // pred_fallthru
      _
    // Predicated region
    $region18: #{tpu_custom_call.1} parent=1 // pred_check
      _
    $region19: #{tpu_custom_call.1} parent=1 // pred_check_branch
      %44 = sbr.rel (0) target = $region21
    $region20: #{tpu_custom_call.1} parent=1 // pred_region
      %46 = dma.done [#allocation6], 512
    $region21: #{tpu_custom_call.1} parent=1 // pred_fallthru
      _
    %v47 = vld [vmem:[#allocation2] sm:$0xff]
    %v48 = vld [vmem:[#allocation2 + $0x8] sm:$0xff]
    %v49 = vld [vmem:[#allocation5] sm:$0xff]
    %v50 = vld [vmem:[#allocation5 + $0x8] sm:$0xff]
    %v51 = vld [vmem:[#allocation5 + $0x10] sm:$0xff]
    %v52 = vld [vmem:[#allocation5 + $0x18] sm:$0xff]
    %v53 = vld [vmem:[%s2] sm:$0x1]
    %v55 = vperm.slane %v53, 0
    %vm57 = vcmask 261120
    %v59 = vsel %vm57, %v47, 0
    %v62 = vsel %vm57, %v48, 0
    %64 = vmatpush.msra.mxu0 0.0
    %65 = vmatpush.msra.mxu0 0.0
    %66 = vmatpush.msra.mxu0 0.0
    %67 = vmatpush.msra.mxu0 0.0
    %68 = vmatpush.msra.mxu0 0.0
    %69 = vmatpush.msra.mxu0 0.0
    %70 = vmatpush.msra.mxu0 0.0
    %71 = vmatpush.msra.mxu0 0.0
    %72 = vmatpush.msra.mxu0 0.0
    %73 = vmatpush.msra.mxu0 0.0
    %74 = vmatpush.msra.mxu0 0.0
    %75 = vmatpush.msra.mxu0 0.0
    %76 = vmatpush.msra.mxu0 %v52
    %77 = vmatpush.msra.mxu0 %v51
    %78 = vmatpush.msra.mxu0 %v50
    %79 = vmatpush.msra.mxu0 %v49
    %80 = vmatmul.f32.gmra.mxu0 %v59
    %v81 = vpop.f32.mrf.mxu0
    %v82 = vadd.f32 %v55, %v81
    %83 = vmatmul.f32.gmra.mxu0 %v62
    %v84 = vpop.f32.mrf.mxu0
    %v85 = vadd.f32 %v55, %v84
    %86 = vdwg.mxu0
    %87 = vst [vmem:[#allocation7] sm:$0xff] %v82
    %88 = vst [vmem:[#allocation7 + $0x8] sm:$0xff] %v85
    // Predicated region
    $region22: #{tpu_custom_call.1} parent=1 // pred_check
      _
    $region23: #{tpu_custom_call.1} parent=1 // pred_check_branch
      %90 = sbr.rel (0) target = $region25
    $region24: #{tpu_custom_call.1} parent=1 // pred_region
      %92 = vsyncadd [#allocation4], 0
      %s93 = sshll.u32 [#allocation7], 4
      %s94 = int_to_ptr.vmem [resolvable:$true] %s93
      %s95 = sshll.u32 %s3, 4
      %s96 = int_to_ptr.hbm [resolvable:$true] %s95
      %101 = dma.vmem_to_hbm [thread:$0]  %s94, 256, %s96, [#allocation4], 128, 128, 8
    $region25: #{tpu_custom_call.1} parent=1 // pred_fallthru
      _
    // Predicated region
    $region26: #{tpu_custom_call.1} parent=1 // pred_check
      _
    $region27: #{tpu_custom_call.1} parent=1 // pred_check_branch
      %103 = sbr.rel (0) target = $region29
    $region28: #{tpu_custom_call.1} parent=1 // pred_region
      %105 = dma.done [#allocation4], 256
    $region29: #{tpu_custom_call.1} parent=1 // pred_fallthru
      _
    %106 = vsyncpa [#allocation3], 1
    %107 = vsyncpa [#allocation6], 1
    %108 = vsyncpa [#allocation4], 1

</llo_original>
